<compile_context>
chip_gen: v5e
topology: v5e:2x2
jax: 0.10.0
libtpu: 0.0.40
codegen_flags: <defaults>
</compile_context>

<pallas_src>
import functools

import jax
import jax.numpy as jnp
from jax import lax
from jax.experimental import pallas as pl
from jax.experimental.pallas import tpu as pltpu


def _round_up(x, m):
    return (x + m - 1) // m * m


def _center_loss_kernel(xs_ref, ys_ref, caug_ref, out_ref, *,
                        tm, num_classes, batch, mask_rows):
    i = pl.program_id(0)

    xs = xs_ref[...]            # (tm, F) f32  (rows past `batch` are garbage)
    ys = ys_ref[...]            # (tm, 1) i32
    caug = caug_ref[...]        # (C, 128 + F) f32 = [1/count, ||c||^2, 0... | c]

    if mask_rows:
        # Scrub out-of-range rows with a select (NOT a multiply): garbage rows
        # may contain Inf/NaN and 0 * NaN would poison the partial sum.
        row = i * tm + lax.broadcasted_iota(jnp.int32, (tm, 1), 0)
        valid = row < batch
        xs = jnp.where(valid, xs, 0.0)

    # One-hot labels for THIS tile only: (tm, C).
    # TODO(synk): for very large C, tile the class dimension (second "arbitrary"
    # grid axis accumulating partial gathers) instead of a full (tm, C) one-hot.
    cls_ids = lax.broadcasted_iota(jnp.int32, (tm, num_classes), 1)
    onehot = (ys == cls_ids).astype(jnp.float32)

    # Single MXU pass gathers [1/count | ||c||^2 | center] for each sample.
    gathered = jnp.dot(onehot, caug, preferred_element_type=jnp.float32)
    inv_cnt = gathered[:, 0:1]           # (tm, 1)
    csq = gathered[:, 1:2]               # (tm, 1)  == ||center[ys]||^2
    center_exp = gathered[:, 128:]       # (tm, F)  (128-lane aligned slice)

    # The only per-(tm, F)-element VPU work: two multiplies + two row reductions.
    sumsq = jnp.sum(xs * xs, axis=1, keepdims=True)            # ||x||^2
    rowdot = jnp.sum(xs * center_exp, axis=1, keepdims=True)   # <x, c>

    # F.normalize semantics: x_n = x / max(||x||, 1e-12); rsqrt runs on the EUP.
    inv_norm = lax.rsqrt(jnp.maximum(sumsq, 1e-24))
    nsq = sumsq * (inv_norm * inv_norm)                        # ||x_n||^2 (0 if x==0)
    d2 = jnp.maximum(nsq - 2.0 * rowdot * inv_norm + csq, 0.0)
    contrib = jnp.sqrt(d2) * inv_cnt

    if mask_rows:
        contrib = jnp.where(valid, contrib, 0.0)

    # Lane-dense, unmasked 128-wide store of this tile's partial sum.
    out_ref[...] = jnp.broadcast_to(jnp.sum(contrib), (1, 1, 128))


def _auto_tile_m(batch, feat, cls):
    """~4 MiB of xs per block, VMEM-budgeted, >=2 grid steps when possible."""
    tm = (4 << 20) // max(4 * feat, 4)
    # Keep double-buffered xs + one-hot + gathered intermediates + resident caug
    # inside ~32 MiB (v7x has only 64 MiB VMEM per TensorCore).
    caug_bytes = 4 * cls * (feat + 128)
    per_row_bytes = 4 * (3 * feat + cls + 192)
    budget = max((32 << 20) - caug_bytes, 64 * per_row_bytes)
    tm = min(tm, budget // per_row_bytes, 2048, _round_up(batch, 8))
    if batch >= 16:                              # feed both v7x TensorCores
        tm = min(tm, _round_up(pl.cdiv(batch, 2), 8))
    return max(8, (tm // 8) * 8)


def center_loss(xs, ys, center, *, tile_m=None):
    """xs: (B, F) float, ys: (B,) int labels in [0, C), center: (C, F) float."""
    B, F = xs.shape
    C, Fc = center.shape
    assert Fc == F

    if tile_m is None:
        tm = _auto_tile_m(B, F, C)
    else:
        tm = max(8, (min(int(tile_m), _round_up(B, 8)) // 8) * 8)
    num_tiles = pl.cdiv(B, tm)
    mask_rows = (B % tm) != 0

    # No batch/feature padding copies of the big tensor; only cheap casts/reshapes.
    xs32 = xs if xs.dtype == jnp.float32 else xs.astype(jnp.float32)
    center32 = center if center.dtype == jnp.float32 else center.astype(jnp.float32)
    ys_i = ys.astype(jnp.int32)
    ys2d = ys_i.reshape(B, 1)

    # Per-class histogram (== torch.histc for in-range integer labels) as an O(B)
    # scatter-add, plus its exact reciprocal (0 for empty classes -> never used).
    count = jnp.zeros((C,), jnp.float32).at[ys_i].add(1.0)
    inv_count = jnp.where(count > 0, 1.0 / jnp.maximum(count, 1.0), 0.0)
    csq = jnp.sum(center32 * center32, axis=1)                       # ||c||^2, (C,)

    # Augmented class table: 128 lane-aligned aux columns, then the raw centers.
    aux = jnp.zeros((C, 128), jnp.float32).at[:, 0].set(inv_count).at[:, 1].set(csq)
    caug = jnp.concatenate([aux, center32], axis=1)                  # (C, 128 + F)
    caug_w = 128 + F

    kernel = functools.partial(_center_loss_kernel, tm=tm, num_classes=C,
                               batch=B, mask_rows=mask_rows)

    # VMEM budget: double-buffered xs/ys blocks + single-buffered caug + temps,
    # capped at 3/4 of the per-core VMEM (48 MiB on v7x, 96 MiB on v5e/v6e).
    vmem_needed = (2 * 4 * tm * F + 2 * 4 * tm + 4 * C * caug_w
                   + 4 * tm * (C + caug_w + 8) + (1 << 20))
    try:
        vmem_cap = int(pltpu.get_tpu_info().vmem_capacity_bytes)
    except Exception:   # pragma: no cover - be conservative if the query fails
        vmem_cap = 64 << 20                      # v7x per-TensorCore VMEM
    vmem_limit = int(min(max(32 << 20, 2 * vmem_needed), (3 * vmem_cap) // 4))

    flops = 2 * num_tiles * tm * C * caug_w + 4 * num_tiles * tm * F
    bytes_accessed = 4 * (B * F + B + C * caug_w + num_tiles * 128)

    def run(single_buffer_caug):
        if single_buffer_caug:
            # Constant index_map -> fetched once; one buffer is enough.
            caug_spec = pl.BlockSpec((C, caug_w), lambda i: (0, 0),
                                     pipeline_mode=pl.Buffered(1))
        else:
            caug_spec = pl.BlockSpec((C, caug_w), lambda i: (0, 0))
        return pl.pallas_call(
            kernel,
            out_shape=jax.ShapeDtypeStruct((num_tiles, 1, 128), jnp.float32),
            grid=(num_tiles,),
            in_specs=[
                pl.BlockSpec((tm, F), lambda i: (i, 0)),     # xs tile (streamed)
                pl.BlockSpec((tm, 1), lambda i: (i, 0)),     # ys tile (streamed)
                caug_spec,                                   # resident class table
            ],
            out_specs=pl.BlockSpec((1, 1, 128), lambda i: (i, 0, 0)),
            compiler_params=pltpu.CompilerParams(
                dimension_semantics=("parallel",),           # tiles split across TCs
                vmem_limit_bytes=vmem_limit),
            cost_estimate=pl.CostEstimate(
                flops=flops, transcendentals=2 * num_tiles * tm,
                bytes_accessed=bytes_accessed),
        )(xs32, ys2d, caug)

    try:
        out = run(True)
    except Exception:   # pragma: no cover - fall back if Buffered(1) is rejected
        out = run(False)

    return jnp.sum(out[:, 0, 0])


def _reference(xs, ys, center):
    """Pure-JAX reference mirroring the PyTorch forward."""
    C = center.shape[0]
    xs_n = xs / jnp.maximum(
        jnp.sqrt(jnp.sum(xs * xs, axis=1, keepdims=True)), 1e-12)
    center_exp = center[ys]
    count = jnp.sum(ys[:, None] == jnp.arange(C)[None, :], axis=0)
    count_dis = count[ys].astype(jnp.float32)
    return jnp.sum(
        jnp.sqrt(jnp.sum((xs_n - center_exp) ** 2, axis=1)) / count_dis)


if __name__ == "__main__":
    key = jax.random.PRNGKey(0)

    # --- small example consistent with the module (single tile, no masking) ---
    batch, feature_num, cls_num = 8, 32, 4
    k_x, k_y, k_c, key = jax.random.split(key, 4)
    xs = jax.random.normal(k_x, (batch, feature_num), dtype=jnp.float32)
    ys = jax.random.randint(k_y, (batch,), 0, cls_num, dtype=jnp.int32)
    center = jax.random.normal(k_c, (cls_num, feature_num), dtype=jnp.float32)

    loss = center_loss(xs, ys, center)
    jax.block_until_ready(loss)
    ref = _reference(xs, ys, center)
    assert jnp.allclose(loss, ref, rtol=1e-5, atol=1e-5), (loss, ref)

    # --- ragged shapes: multi-tile grid, partial last block, in-kernel masking ---
    batch2, feature2, cls2 = 130, 40, 6
    k_x2, k_y2, k_c2, key = jax.random.split(key, 4)
    xs2 = jax.random.normal(k_x2, (batch2, feature2), dtype=jnp.float32)
    ys2 = jax.random.randint(k_y2, (batch2,), 0, cls2, dtype=jnp.int32)
    center2 = jax.random.normal(k_c2, (cls2, feature2), dtype=jnp.float32)

    ref2 = _reference(xs2, ys2, center2)

    loss2a = center_loss(xs2, ys2, center2)              # auto tiling (2 tiles)
    jax.block_until_ready(loss2a)
    assert jnp.allclose(loss2a, ref2, rtol=1e-5, atol=1e-5), (loss2a, ref2)

    loss2b = center_loss(xs2, ys2, center2, tile_m=64)   # forces 3 batch tiles
    jax.block_until_ready(loss2b)
    assert jnp.allclose(loss2b, ref2, rtol=1e-5, atol=1e-5), (loss2b, ref2)

    print("KERNEL_OK")
</pallas_src>

<mosaic_0001>
module attributes {stable_mosaic.version = 11 : i64} {
  func.func @_center_loss_kernel(%arg0: i32, %arg1: memref<8x32xf32, #tpu.memory_space<vmem>>, %arg2: memref<8x1xi32, #tpu.memory_space<vmem>>, %arg3: memref<4x160xf32, #tpu.memory_space<vmem>>, %arg4: memref<1x1x128xf32, #tpu.memory_space<vmem>>) attributes {dimension_semantics = [#tpu.dimension_semantics<parallel>], iteration_bounds = array<i64: 1>, scalar_prefetch = 0 : i64, scratch_operands = 0 : i64, tpu.core_type = #tpu.core_type<tc>, window_params = [{transform_indices = @transform_0, window_bounds = array<i64: 8, 32>}, {transform_indices = @transform_1, window_bounds = array<i64: 8, 1>}, {pipeline_mode = #tpu.pipeline_mode<synchronous>, transform_indices = @transform_2, window_bounds = array<i64: 4, 160>}, {transform_indices = @transform_3, window_bounds = array<i64: 1, 1, 128>}]} {
    %c0 = arith.constant 0 : index
    %c0_0 = arith.constant 0 : index
    %0 = vector.load %arg1[%c0, %c0_0] : memref<8x32xf32, #tpu.memory_space<vmem>>, vector<8x32xf32>
    %c0_1 = arith.constant 0 : index
    %c0_2 = arith.constant 0 : index
    %1 = vector.load %arg2[%c0_1, %c0_2] : memref<8x1xi32, #tpu.memory_space<vmem>>, vector<8x1xi32>
    %c0_3 = arith.constant 0 : index
    %c0_4 = arith.constant 0 : index
    %2 = vector.load %arg3[%c0_3, %c0_4] : memref<4x160xf32, #tpu.memory_space<vmem>>, vector<4x160xf32>
    %3 = tpu.iota {dimensions = array<i32: 1>} : vector<8x4xi32>
    %4 = vector.broadcast %1 : vector<8x1xi32> to vector<8x4xi32>
    %5 = arith.cmpi eq, %4, %3 : vector<8x4xi32>
    %6 = arith.extui %5 : vector<8x4xi1> to vector<8x4xi32>
    %7 = arith.sitofp %6 : vector<8x4xi32> to vector<8x4xf32>
    %cst = arith.constant dense<0.000000e+00> : vector<8x160xf32>
    %8 = tpu.matmul %7, %2, %cst {dimension_numbers = #tpu.dot_dimension_numbers<[1], [0], [0], [1], [0, 0, 1, 1], [], []>} : vector<8x4xf32>, vector<4x160xf32>, vector<8x160xf32> -> vector<8x160xf32>
    %9 = vector.extract_strided_slice %8 {offsets = [0, 0], sizes = [8, 1], strides = [1, 1]} : vector<8x160xf32> to vector<8x1xf32>
    %10 = vector.extract_strided_slice %8 {offsets = [0, 1], sizes = [8, 1], strides = [1, 1]} : vector<8x160xf32> to vector<8x1xf32>
    %11 = vector.extract_strided_slice %8 {offsets = [0, 128], sizes = [8, 32], strides = [1, 1]} : vector<8x160xf32> to vector<8x32xf32>
    %12 = arith.mulf %0, %0 : vector<8x32xf32>
    %cst_5 = arith.constant dense<0.000000e+00> : vector<8xf32>
    %13 = vector.multi_reduction <add>, %12, %cst_5 [1] : vector<8x32xf32> to vector<8xf32>
    %14 = vector.shape_cast %13 : vector<8xf32> to vector<8x1xf32>
    %15 = arith.mulf %0, %11 : vector<8x32xf32>
    %cst_6 = arith.constant dense<0.000000e+00> : vector<8xf32>
    %16 = vector.multi_reduction <add>, %15, %cst_6 [1] : vector<8x32xf32> to vector<8xf32>
    %17 = vector.shape_cast %16 : vector<8xf32> to vector<8x1xf32>
    %cst_7 = arith.constant 1.000000e-24 : f32
    %18 = vector.broadcast %cst_7 : f32 to vector<8x1xf32>
    %19 = arith.maximumf %14, %18 : vector<8x1xf32>
    %20 = math.rsqrt %19 : vector<8x1xf32>
    %21 = arith.mulf %20, %20 : vector<8x1xf32>
    %22 = arith.mulf %14, %21 : vector<8x1xf32>
    %cst_8 = arith.constant 2.000000e+00 : f32
    %23 = vector.broadcast %cst_8 : f32 to vector<8x1xf32>
    %24 = arith.mulf %23, %17 : vector<8x1xf32>
    %25 = arith.mulf %24, %20 : vector<8x1xf32>
    %26 = arith.subf %22, %25 : vector<8x1xf32>
    %27 = arith.addf %26, %10 : vector<8x1xf32>
    %cst_9 = arith.constant 0.000000e+00 : f32
    %28 = vector.broadcast %cst_9 : f32 to vector<8x1xf32>
    %29 = arith.maximumf %27, %28 : vector<8x1xf32>
    %30 = math.sqrt %29 : vector<8x1xf32>
    %31 = arith.mulf %30, %9 : vector<8x1xf32>
    %32 = vector.shape_cast %31 : vector<8x1xf32> to vector<1x8x1xf32>
    %cst_10 = arith.constant dense<0.000000e+00> : vector<1xf32>
    %33 = vector.multi_reduction <add>, %32, %cst_10 [1, 2] : vector<1x8x1xf32> to vector<1xf32>
    %34 = vector.shape_cast %33 : vector<1xf32> to vector<1x1x1xf32>
    %35 = vector.extract %34[0, 0, 0] : f32 from vector<1x1x1xf32>
    %36 = vector.broadcast %35 : f32 to vector<1x1x128xf32>
    %c0_11 = arith.constant 0 : index
    %c0_12 = arith.constant 0 : index
    %c0_13 = arith.constant 0 : index
    %37 = vector.load %arg4[%c0_11, %c0_12, %c0_13] : memref<1x1x128xf32, #tpu.memory_space<vmem>>, vector<1x1x128xf32>
    tpu.vector_store %arg4[%c0_11, %c0_12, %c0_13], %36 {strides = array<i32>} : memref<1x1x128xf32, #tpu.memory_space<vmem>>, vector<1x1x128xf32>,
    return
  }
  func.func @transform_0(%arg0: i32) -> (i32, i32) {
    %c0_i32 = arith.constant 0 : i32
    %c0_i32_0 = arith.constant 0 : i32
    return %arg0, %c0_i32 : i32, i32
  }
  func.func @transform_1(%arg0: i32) -> (i32, i32) {
    %c0_i32 = arith.constant 0 : i32
    %c0_i32_0 = arith.constant 0 : i32
    return %arg0, %c0_i32 : i32, i32
  }
  func.func @transform_2(%arg0: i32) -> (i32, i32) {
    %c0_i32 = arith.constant 0 : i32
    %c0_i32_0 = arith.constant 0 : i32
    %c0_i32_1 = arith.constant 0 : i32
    return %c0_i32, %c0_i32_0 : i32, i32
  }
  func.func @transform_3(%arg0: i32) -> (i32, i32, i32) {
    %c0_i32 = arith.constant 0 : i32
    %c0_i32_0 = arith.constant 0 : i32
    %c0_i32_1 = arith.constant 0 : i32
    return %arg0, %c0_i32, %c0_i32_0 : i32, i32, i32
  }
}

module attributes {stable_mosaic.version = 11 : i64} {
  func.func @_center_loss_kernel(%arg0: i32, %arg1: memref<8x32xf32, #tpu.memory_space<vmem>>, %arg2: memref<8x1xi32, #tpu.memory_space<vmem>>, %arg3: memref<4x160xf32, #tpu.memory_space<vmem>>, %arg4: memref<1x1x128xf32, #tpu.memory_space<vmem>>) attributes {dimension_semantics = [#tpu.dimension_semantics<parallel>], iteration_bounds = array<i64: 1>, scalar_prefetch = 0 : i64, scratch_operands = 0 : i64, tpu.core_type = #tpu.core_type<tc>, window_params = [{transform_indices = @transform_0, window_bounds = array<i64: 8, 32>}, {transform_indices = @transform_1, window_bounds = array<i64: 8, 1>}, {pipeline_mode = #tpu.pipeline_mode<synchronous>, transform_indices = @transform_2, window_bounds = array<i64: 4, 160>}, {transform_indices = @transform_3, window_bounds = array<i64: 1, 1, 128>}]} {
    %c0 = arith.constant 0 : index
    %c0_0 = arith.constant 0 : index
    %0 = vector.load %arg1[%c0, %c0_0] : memref<8x32xf32, #tpu.memory_space<vmem>>, vector<8x32xf32>
    %c0_1 = arith.constant 0 : index
    %c0_2 = arith.constant 0 : index
    %1 = vector.load %arg2[%c0_1, %c0_2] : memref<8x1xi32, #tpu.memory_space<vmem>>, vector<8x1xi32>
    %c0_3 = arith.constant 0 : index
    %c0_4 = arith.constant 0 : index
    %2 = vector.load %arg3[%c0_3, %c0_4] : memref<4x160xf32, #tpu.memory_space<vmem>>, vector<4x160xf32>
    %3 = tpu.iota {dimensions = array<i32: 1>} : vector<8x4xi32>
    %4 = vector.broadcast %1 : vector<8x1xi32> to vector<8x4xi32>
    %5 = arith.cmpi eq, %4, %3 : vector<8x4xi32>
    %6 = arith.extui %5 : vector<8x4xi1> to vector<8x4xi32>
    %7 = arith.sitofp %6 : vector<8x4xi32> to vector<8x4xf32>
    %cst = arith.constant dense<0.000000e+00> : vector<8x160xf32>
    %8 = tpu.matmul %7, %2, %cst {dimension_numbers = #tpu.dot_dimension_numbers<[1], [0], [0], [1], [0, 0, 1, 1], [], []>} : vector<8x4xf32>, vector<4x160xf32>, vector<8x160xf32> -> vector<8x160xf32>
    %9 = vector.extract_strided_slice %8 {offsets = [0, 0], sizes = [8, 1], strides = [1, 1]} : vector<8x160xf32> to vector<8x1xf32>
    %10 = vector.extract_strided_slice %8 {offsets = [0, 1], sizes = [8, 1], strides = [1, 1]} : vector<8x160xf32> to vector<8x1xf32>
    %11 = vector.extract_strided_slice %8 {offsets = [0, 128], sizes = [8, 32], strides = [1, 1]} : vector<8x160xf32> to vector<8x32xf32>
    %12 = arith.mulf %0, %0 : vector<8x32xf32>
    %cst_5 = arith.constant dense<0.000000e+00> : vector<8xf32>
    %13 = vector.multi_reduction <add>, %12, %cst_5 [1] : vector<8x32xf32> to vector<8xf32>
    %14 = vector.shape_cast %13 : vector<8xf32> to vector<8x1xf32>
    %15 = arith.mulf %0, %11 : vector<8x32xf32>
    %cst_6 = arith.constant dense<0.000000e+00> : vector<8xf32>
    %16 = vector.multi_reduction <add>, %15, %cst_6 [1] : vector<8x32xf32> to vector<8xf32>
    %17 = vector.shape_cast %16 : vector<8xf32> to vector<8x1xf32>
    %cst_7 = arith.constant 1.000000e-24 : f32
    %18 = vector.broadcast %cst_7 : f32 to vector<8x1xf32>
    %19 = arith.maximumf %14, %18 : vector<8x1xf32>
    %20 = math.rsqrt %19 : vector<8x1xf32>
    %21 = arith.mulf %20, %20 : vector<8x1xf32>
    %22 = arith.mulf %14, %21 : vector<8x1xf32>
    %cst_8 = arith.constant 2.000000e+00 : f32
    %23 = vector.broadcast %cst_8 : f32 to vector<8x1xf32>
    %24 = arith.mulf %23, %17 : vector<8x1xf32>
    %25 = arith.mulf %24, %20 : vector<8x1xf32>
    %26 = arith.subf %22, %25 : vector<8x1xf32>
    %27 = arith.addf %26, %10 : vector<8x1xf32>
    %cst_9 = arith.constant 0.000000e+00 : f32
    %28 = vector.broadcast %cst_9 : f32 to vector<8x1xf32>
    %29 = arith.maximumf %27, %28 : vector<8x1xf32>
    %30 = math.sqrt %29 : vector<8x1xf32>
    %31 = arith.mulf %30, %9 : vector<8x1xf32>
    %32 = vector.shape_cast %31 : vector<8x1xf32> to vector<1x8x1xf32>
    %cst_10 = arith.constant dense<0.000000e+00> : vector<1xf32>
    %33 = vector.multi_reduction <add>, %32, %cst_10 [1, 2] : vector<1x8x1xf32> to vector<1xf32>
    %34 = vector.shape_cast %33 : vector<1xf32> to vector<1x1x1xf32>
    %35 = vector.extract %34[0, 0, 0] : f32 from vector<1x1x1xf32>
    %36 = vector.broadcast %35 : f32 to vector<1x1x128xf32>
    %c0_11 = arith.constant 0 : index
    %c0_12 = arith.constant 0 : index
    %c0_13 = arith.constant 0 : index
    %37 = vector.load %arg4[%c0_11, %c0_12, %c0_13] : memref<1x1x128xf32, #tpu.memory_space<vmem>>, vector<1x1x128xf32>
    tpu.vector_store %arg4[%c0_11, %c0_12, %c0_13], %36 {strides = array<i32>} : memref<1x1x128xf32, #tpu.memory_space<vmem>>, vector<1x1x128xf32>,
    return
  }
  func.func @transform_0(%arg0: i32) -> (i32, i32) {
    %c0_i32 = arith.constant 0 : i32
    %c0_i32_0 = arith.constant 0 : i32
    return %arg0, %c0_i32 : i32, i32
  }
  func.func @transform_1(%arg0: i32) -> (i32, i32) {
    %c0_i32 = arith.constant 0 : i32
    %c0_i32_0 = arith.constant 0 : i32
    return %arg0, %c0_i32 : i32, i32
  }
  func.func @transform_2(%arg0: i32) -> (i32, i32) {
    %c0_i32 = arith.constant 0 : i32
    %c0_i32_0 = arith.constant 0 : i32
    %c0_i32_1 = arith.constant 0 : i32
    return %c0_i32, %c0_i32_0 : i32, i32
  }
  func.func @transform_3(%arg0: i32) -> (i32, i32, i32) {
    %c0_i32 = arith.constant 0 : i32
    %c0_i32_0 = arith.constant 0 : i32
    %c0_i32_1 = arith.constant 0 : i32
    return %arg0, %c0_i32, %c0_i32_0 : i32, i32, i32
  }
}

</mosaic_0001>

<llo_original>
// kernel: tpu_custom_call.1
$region0: #{tpu_custom_call.1}
  #allocation0 [shape = 'u32[]', space=smem, size = 0x4, offset = 0x4, fixed_abs, tag = 'smem constant byte address 0x4 - core index']
  #allocation1 [shape = 'u32[72,128]{1,0:T(1,128)}', space=vmem, size = 0x9000, scoped, tag = 'internal scratch']
  %s0 = inlined_call_operand.vmem [shape: f32[8,32], index: 0, kind: input, shape index: {}]
  %s1 = inlined_call_operand.vmem [shape: s32[8,1], index: 1, kind: input, shape index: {}]
  %s2 = inlined_call_operand.hbm [shape: f32[4,160], index: 2, kind: input, shape index: {}]
  %s3 = inlined_call_operand.hbm [shape: f32[1,1,128], index: 3, kind: output, shape index: {}]
  %s4 = sld [smem:[#allocation0]]
  $region26: #{tpu_custom_call.1} parent=0
    _
  %s6 = ssub.s32 1, %s4
  %s7 = scalar_select 0, %s6, %s4
  $region1: #{tpu_custom_call.1} parent=0
    #allocation2 [shape = 'u8[4096]{0}', space=vmem, size = 0x1000, scoped, tag = 'input window, operand 2, single buffered']
    #allocation3 [shape = 's32[1]{0}', space=sflag, size = 0x4, scoped, tag = 'scoped memory for tpu_custom_call.1']
    #allocation4 [shape = 's32[1]{0}', space=sflag, size = 0x4, scoped, tag = 'scoped memory for tpu_custom_call.1']
    #allocation5 [shape = 'u8[512]{0}', space=vmem, size = 0x400, scoped, tag = 'output window, operand 0, single buffered']
    %8 = vsyncpa [#allocation3], 0
    %9 = vsyncpa [#allocation4], 0
    // Predicated region
    $region2: #{tpu_custom_call.1} parent=1 // pred_check
      _
    $region3: #{tpu_custom_call.1} parent=1 // pred_check_branch
      %11 = sbr.rel (0) target = $region5
    $region4: #{tpu_custom_call.1} parent=1 // pred_region
      _
    $region5: #{tpu_custom_call.1} parent=1 // pred_fallthru
      _
    // Predicated region
    $region6: #{tpu_custom_call.1} parent=1 // pred_check
      _
    $region7: #{tpu_custom_call.1} parent=1 // pred_check_branch
      %13 = sbr.rel (0) target = $region9
    $region8: #{tpu_custom_call.1} parent=1 // pred_region
      _
    $region9: #{tpu_custom_call.1} parent=1 // pred_fallthru
      _
    // Predicated region
    $region10: #{tpu_custom_call.1} parent=1 // pred_check
      _
    $region11: #{tpu_custom_call.1} parent=1 // pred_check_branch
      %15 = sbr.rel (0) target = $region13
    $region12: #{tpu_custom_call.1} parent=1 // pred_region
      %17 = vsyncadd [#allocation3], 0
      %s19 = sshll.u32 %s2, 4
      %s20 = int_to_ptr.hbm [resolvable:$true] %s19
      %s21 = sshll.u32 [#allocation2], 4
      %s22 = int_to_ptr.vmem [resolvable:$true] %s21
      %24 = dma.hbm_to_vmem [thread:$0]  %s20, 128, %s22, [#allocation3]
    $region13: #{tpu_custom_call.1} parent=1 // pred_fallthru
      _
    // Predicated region
    $region14: #{tpu_custom_call.1} parent=1 // pred_check
      _
    $region15: #{tpu_custom_call.1} parent=1 // pred_check_branch
      %26 = sbr.rel (0) target = $region17
    $region16: #{tpu_custom_call.1} parent=1 // pred_region
      %28 = dma.done [#allocation3], 128
    $region17: #{tpu_custom_call.1} parent=1 // pred_fallthru
      _
    %v29 = vld [vmem:[%s0] sm:$0xff]
    %v30 = vld [vmem:[%s1] sm:$0xff]
    %v31 = vld [vmem:[#allocation2] sm:$0xff]
    %v32 = vlaneseq
    %v33 = vand.u32 %v32, 127
    %34 = vset.pattern.permute.xlu0 0
    %35 = vperm.xlu0 %34, %v30
    %v36 = vpop.permute.xlu0 %35
    %vm37 = vcmp.eq.s32.totalorder %v36, %v33
    %v38 = vsel %vm37, 1, 0
    %v39 = vcvt.s32.f32 %v38
    %41 = vst [vmem:[#allocation1] ss:$2 sm:$0xff] %v31
    %v42 = vld.sshfl [vmem:[#allocation1] sm:$0xff pattern:$0x75316420]
    %v43 = vld.sshfl [vmem:[#allocation1 + $0x8] sm:$0xff pattern:$0x75316420]
    %vm44 = vcmask 31744
    %v46 = vsel %vm44, %v39, 0
    %vm48 = vcmask 1043456
    %v49 = vsel %vm48, %v42, 0
    %v51 = vsel %vm48, %v43, 0
    %53 = vmatpush.msra.mxu0 0.0
    %54 = vmatpush.msra.mxu0 0.0
    %55 = vmatpush.msra.mxu0 0.0
    %56 = vmatpush.msra.mxu0 0.0
    %57 = vmatpush.msra.mxu0 0.0
    %58 = vmatpush.msra.mxu0 0.0
    %59 = vmatpush.msra.mxu0 0.0
    %60 = vmatpush.msra.mxu0 0.0
    %61 = vmatpush.msra.mxu0 0.0
    %62 = vmatpush.msra.mxu0 0.0
    %63 = vmatpush.msra.mxu0 0.0
    %64 = vmatpush.msra.mxu0 0.0
    %65 = vmatpush.msra.mxu0 0.0
    %66 = vmatpush.msra.mxu0 0.0
    %67 = vmatpush.msra.mxu0 0.0
    %68 = vmatpush.msra.mxu0 %v49
    %69 = vmatmul.f32.gmra.mxu0 %v46
    %v70 = vpop.f32.mrf.mxu0
    %v71 = vadd.f32 0.0, %v70
    %72 = vdwg.mxu0
    %73 = vmatpush.msra.mxu0 0.0
    %74 = vmatpush.msra.mxu0 0.0
    %75 = vmatpush.msra.mxu0 0.0
    %76 = vmatpush.msra.mxu0 0.0
    %77 = vmatpush.msra.mxu0 0.0
    %78 = vmatpush.msra.mxu0 0.0
    %79 = vmatpush.msra.mxu0 0.0
    %80 = vmatpush.msra.mxu0 0.0
    %81 = vmatpush.msra.mxu0 0.0
    %82 = vmatpush.msra.mxu0 0.0
    %83 = vmatpush.msra.mxu0 0.0
    %84 = vmatpush.msra.mxu0 0.0
    %85 = vmatpush.msra.mxu0 0.0
    %86 = vmatpush.msra.mxu0 0.0
    %87 = vmatpush.msra.mxu0 0.0
    %88 = vmatpush.msra.mxu0 %v51
    %89 = vmatmul.f32.gmra.mxu0 %v46
    %v90 = vpop.f32.mrf.mxu0
    %v91 = vadd.f32 0.0, %v90
    %92 = vdwg.mxu0
    %v93 = vmul.f32 %v29, %v29
    %vm94 = vcmask 261120
    %v95 = vsel %vm94, %v93, 0.0
    %96 = vadd.xlane.f32.xlu0 %v95
    %v97 = vpop.xlane.xlu0 %96
    %v98 = vmul.f32 %v29, %v91
    %v99 = vsel %vm94, %v98, 0.0
    %100 = vadd.xlane.f32.xlu0 %v99
    %v101 = vpop.xlane.xlu0 %100
    %v102 = vmax.f32 %v97, 1e-24
    %v103 = vrsqrt.pop %v102
    %v104 = vmul.f32 %v103, %v102
    %v105 = vmul.f32 %v104, %v103
    %v106 = vmul.f32 0.5, %v105
    %v107 = vsub.f32 1.5, %v106
    %v108 = vmul.f32 %v103, %v107
    %vm109 = vweird.f32 %v102
    %vm110 = vweird.f32 %v103
    %vm111 = vmor %vm109, %vm110
    %v112 = vsel %vm111, %v103, %v108
    %v113 = vmul.f32 %v112, %v112
    %v114 = vmul.f32 %v97, %v113
    %v115 = vmul.f32 %v101, 2.0
    %v116 = vmul.f32 %v115, %v112
    %v117 = vsub.f32 %v114, %v116
    %v118 = vadd.f32 %v117, %v71
    %v119 = vmax.f32 %v118, 0.0
    %v120 = vrsqrt.pop %v119
    %v121 = vmul.f32 %v120, %v119
    %v122 = vmul.f32 %v121, %v120
    %v123 = vmul.f32 0.5, %v122
    %v124 = vsub.f32 1.5, %v123
    %v125 = vmul.f32 %v120, %v124
    %v126 = vmul.f32 %v119, %v125
    %vm127 = vcmp.eq.f32.partialorder %v119, inf
    %v128 = vsel %vm127, %v119, %v126
    %vm129 = vcmp.eq.f32.partialorder %v119, 0.0
    %v130 = vand.u32 %v119, 2147483648
    %v131 = vsel %vm129, %v130, %v128
    %133 = vrot.lane.b32.xlu0 %v71, 1
    %v134 = vpop.permute.xlu0 %133
    %v136 = vmul.f32 %v131, %v134
    %138 = vrot.lane.b32.xlu0 %v136, 127
    %v139 = vpop.permute.xlu0 %138
    %vm141 = vcmask 7168
    %v142 = vsel %vm141, %v139, 0.0
    %143 = vadd.xlane.f32.xlu0 %v142
    %v144 = vpop.xlane.xlu0 %143
    %v145 = vrot.slane %v144, 4
    %v146 = vadd.f32 %v144, %v145
    %v147 = vrot.slane %v146, 2
    %v148 = vadd.f32 %v146, %v147
    %v149 = vrot.slane %v148, 1
    %v150 = vadd.f32 %v148, %v149
    %s151 = vtos %v150
    %v152 = vstv %s151
    %153 = vst [vmem:[#allocation5] sm:$0x1] %v152
    // Predicated region
    $region18: #{tpu_custom_call.1} parent=1 // pred_check
      _
    $region19: #{tpu_custom_call.1} parent=1 // pred_check_branch
      %155 = sbr.rel (0) target = $region21
    $region20: #{tpu_custom_call.1} parent=1 // pred_region
      %157 = vsyncadd [#allocation4], 0
      %s159 = sshll.u32 [#allocation5], 4
      %s160 = int_to_ptr.vmem [resolvable:$true] %s159
      %s161 = sshll.u32 %s3, 4
      %s162 = int_to_ptr.hbm [resolvable:$true] %s161
      %164 = dma.vmem_to_hbm [thread:$0]  %s160, 16, %s162, [#allocation4]
    $region21: #{tpu_custom_call.1} parent=1 // pred_fallthru
      _
    // Predicated region
    $region22: #{tpu_custom_call.1} parent=1 // pred_check
      _
    $region23: #{tpu_custom_call.1} parent=1 // pred_check_branch
      %166 = sbr.rel (0) target = $region25
    $region24: #{tpu_custom_call.1} parent=1 // pred_region
      %168 = dma.done [#allocation4], 16
    $region25: #{tpu_custom_call.1} parent=1 // pred_fallthru
      _
    %169 = vsyncpa [#allocation3], 1
    %170 = vsyncpa [#allocation4], 1

// kernel: tpu_custom_call.1
$region0: #{tpu_custom_call.1}
  #allocation0 [shape = 'u32[]', space=smem, size = 0x4, offset = 0x4, fixed_abs, tag = 'smem constant byte address 0x4 - core index']
  #allocation1 [shape = 'u32[72,128]{1,0:T(1,128)}', space=vmem, size = 0x9000, scoped, tag = 'internal scratch']
  %s0 = inlined_call_operand.vmem [shape: f32[8,32], index: 0, kind: input, shape index: {}]
  %s1 = inlined_call_operand.vmem [shape: s32[8,1], index: 1, kind: input, shape index: {}]
  %s2 = inlined_call_operand.hbm [shape: f32[4,160], index: 2, kind: input, shape index: {}]
  %s3 = inlined_call_operand.hbm [shape: f32[1,1,128], index: 3, kind: output, shape index: {}]
  %s4 = sld [smem:[#allocation0]]
  $region26: #{tpu_custom_call.1} parent=0
    _
  %s6 = ssub.s32 1, %s4
  %s7 = scalar_select 0, %s6, %s4
  $region1: #{tpu_custom_call.1} parent=0
    #allocation2 [shape = 'u8[4096]{0}', space=vmem, size = 0x1000, scoped, tag = 'input window, operand 2, single buffered']
    #allocation3 [shape = 's32[1]{0}', space=sflag, size = 0x4, scoped, tag = 'scoped memory for tpu_custom_call.1']
    #allocation4 [shape = 's32[1]{0}', space=sflag, size = 0x4, scoped, tag = 'scoped memory for tpu_custom_call.1']
    #allocation5 [shape = 'u8[512]{0}', space=vmem, size = 0x400, scoped, tag = 'output window, operand 0, single buffered']
    %8 = vsyncpa [#allocation3], 0
    %9 = vsyncpa [#allocation4], 0
    // Predicated region
    $region2: #{tpu_custom_call.1} parent=1 // pred_check
      _
    $region3: #{tpu_custom_call.1} parent=1 // pred_check_branch
      %11 = sbr.rel (0) target = $region5
    $region4: #{tpu_custom_call.1} parent=1 // pred_region
      _
    $region5: #{tpu_custom_call.1} parent=1 // pred_fallthru
      _
    // Predicated region
    $region6: #{tpu_custom_call.1} parent=1 // pred_check
      _
    $region7: #{tpu_custom_call.1} parent=1 // pred_check_branch
      %13 = sbr.rel (0) target = $region9
    $region8: #{tpu_custom_call.1} parent=1 // pred_region
      _
    $region9: #{tpu_custom_call.1} parent=1 // pred_fallthru
      _
    // Predicated region
    $region10: #{tpu_custom_call.1} parent=1 // pred_check
      _
    $region11: #{tpu_custom_call.1} parent=1 // pred_check_branch
      %15 = sbr.rel (0) target = $region13
    $region12: #{tpu_custom_call.1} parent=1 // pred_region
      %17 = vsyncadd [#allocation3], 0
      %s19 = sshll.u32 %s2, 4
      %s20 = int_to_ptr.hbm [resolvable:$true] %s19
      %s21 = sshll.u32 [#allocation2], 4
      %s22 = int_to_ptr.vmem [resolvable:$true] %s21
      %24 = dma.hbm_to_vmem [thread:$0]  %s20, 128, %s22, [#allocation3]
    $region13: #{tpu_custom_call.1} parent=1 // pred_fallthru
      _
    // Predicated region
    $region14: #{tpu_custom_call.1} parent=1 // pred_check
      _
    $region15: #{tpu_custom_call.1} parent=1 // pred_check_branch
      %26 = sbr.rel (0) target = $region17
    $region16: #{tpu_custom_call.1} parent=1 // pred_region
      %28 = dma.done [#allocation3], 128
    $region17: #{tpu_custom_call.1} parent=1 // pred_fallthru
      _
    %v29 = vld [vmem:[%s0] sm:$0xff]
    %v30 = vld [vmem:[%s1] sm:$0xff]
    %v31 = vld [vmem:[#allocation2] sm:$0xff]
    %v32 = vlaneseq
    %v33 = vand.u32 %v32, 127
    %34 = vset.pattern.permute.xlu0 0
    %35 = vperm.xlu0 %34, %v30
    %v36 = vpop.permute.xlu0 %35
    %vm37 = vcmp.eq.s32.totalorder %v36, %v33
    %v38 = vsel %vm37, 1, 0
    %v39 = vcvt.s32.f32 %v38
    %41 = vst [vmem:[#allocation1] ss:$2 sm:$0xff] %v31
    %v42 = vld.sshfl [vmem:[#allocation1] sm:$0xff pattern:$0x75316420]
    %v43 = vld.sshfl [vmem:[#allocation1 + $0x8] sm:$0xff pattern:$0x75316420]
    %vm44 = vcmask 31744
    %v46 = vsel %vm44, %v39, 0
    %vm48 = vcmask 1043456
    %v49 = vsel %vm48, %v42, 0
    %v51 = vsel %vm48, %v43, 0
    %53 = vmatpush.msra.mxu0 0.0
    %54 = vmatpush.msra.mxu0 0.0
    %55 = vmatpush.msra.mxu0 0.0
    %56 = vmatpush.msra.mxu0 0.0
    %57 = vmatpush.msra.mxu0 0.0
    %58 = vmatpush.msra.mxu0 0.0
    %59 = vmatpush.msra.mxu0 0.0
    %60 = vmatpush.msra.mxu0 0.0
    %61 = vmatpush.msra.mxu0 0.0
    %62 = vmatpush.msra.mxu0 0.0
    %63 = vmatpush.msra.mxu0 0.0
    %64 = vmatpush.msra.mxu0 0.0
    %65 = vmatpush.msra.mxu0 0.0
    %66 = vmatpush.msra.mxu0 0.0
    %67 = vmatpush.msra.mxu0 0.0
    %68 = vmatpush.msra.mxu0 %v49
    %69 = vmatmul.f32.gmra.mxu0 %v46
    %v70 = vpop.f32.mrf.mxu0
    %v71 = vadd.f32 0.0, %v70
    %72 = vdwg.mxu0
    %73 = vmatpush.msra.mxu0 0.0
    %74 = vmatpush.msra.mxu0 0.0
    %75 = vmatpush.msra.mxu0 0.0
    %76 = vmatpush.msra.mxu0 0.0
    %77 = vmatpush.msra.mxu0 0.0
    %78 = vmatpush.msra.mxu0 0.0
    %79 = vmatpush.msra.mxu0 0.0
    %80 = vmatpush.msra.mxu0 0.0
    %81 = vmatpush.msra.mxu0 0.0
    %82 = vmatpush.msra.mxu0 0.0
    %83 = vmatpush.msra.mxu0 0.0
    %84 = vmatpush.msra.mxu0 0.0
    %85 = vmatpush.msra.mxu0 0.0
    %86 = vmatpush.msra.mxu0 0.0
    %87 = vmatpush.msra.mxu0 0.0
    %88 = vmatpush.msra.mxu0 %v51
    %89 = vmatmul.f32.gmra.mxu0 %v46
    %v90 = vpop.f32.mrf.mxu0
    %v91 = vadd.f32 0.0, %v90
    %92 = vdwg.mxu0
    %v93 = vmul.f32 %v29, %v29
    %vm94 = vcmask 261120
    %v95 = vsel %vm94, %v93, 0.0
    %96 = vadd.xlane.f32.xlu0 %v95
    %v97 = vpop.xlane.xlu0 %96
    %v98 = vmul.f32 %v29, %v91
    %v99 = vsel %vm94, %v98, 0.0
    %100 = vadd.xlane.f32.xlu0 %v99
    %v101 = vpop.xlane.xlu0 %100
    %v102 = vmax.f32 %v97, 1e-24
    %v103 = vrsqrt.pop %v102
    %v104 = vmul.f32 %v103, %v102
    %v105 = vmul.f32 %v104, %v103
    %v106 = vmul.f32 0.5, %v105
    %v107 = vsub.f32 1.5, %v106
    %v108 = vmul.f32 %v103, %v107
    %vm109 = vweird.f32 %v102
    %vm110 = vweird.f32 %v103
    %vm111 = vmor %vm109, %vm110
    %v112 = vsel %vm111, %v103, %v108
    %v113 = vmul.f32 %v112, %v112
    %v114 = vmul.f32 %v97, %v113
    %v115 = vmul.f32 %v101, 2.0
    %v116 = vmul.f32 %v115, %v112
    %v117 = vsub.f32 %v114, %v116
    %v118 = vadd.f32 %v117, %v71
    %v119 = vmax.f32 %v118, 0.0
    %v120 = vrsqrt.pop %v119
    %v121 = vmul.f32 %v120, %v119
    %v122 = vmul.f32 %v121, %v120
    %v123 = vmul.f32 0.5, %v122
    %v124 = vsub.f32 1.5, %v123
    %v125 = vmul.f32 %v120, %v124
    %v126 = vmul.f32 %v119, %v125
    %vm127 = vcmp.eq.f32.partialorder %v119, inf
    %v128 = vsel %vm127, %v119, %v126
    %vm129 = vcmp.eq.f32.partialorder %v119, 0.0
    %v130 = vand.u32 %v119, 2147483648
    %v131 = vsel %vm129, %v130, %v128
    %133 = vrot.lane.b32.xlu0 %v71, 1
    %v134 = vpop.permute.xlu0 %133
    %v136 = vmul.f32 %v131, %v134
    %138 = vrot.lane.b32.xlu0 %v136, 127
    %v139 = vpop.permute.xlu0 %138
    %vm141 = vcmask 7168
    %v142 = vsel %vm141, %v139, 0.0
    %143 = vadd.xlane.f32.xlu0 %v142
    %v144 = vpop.xlane.xlu0 %143
    %v145 = vrot.slane %v144, 4
    %v146 = vadd.f32 %v144, %v145
    %v147 = vrot.slane %v146, 2
    %v148 = vadd.f32 %v146, %v147
    %v149 = vrot.slane %v148, 1
    %v150 = vadd.f32 %v148, %v149
    %s151 = vtos %v150
    %v152 = vstv %s151
    %153 = vst [vmem:[#allocation5] sm:$0x1] %v152
    // Predicated region
    $region18: #{tpu_custom_call.1} parent=1 // pred_check
      _
    $region19: #{tpu_custom_call.1} parent=1 // pred_check_branch
      %155 = sbr.rel (0) target = $region21
    $region20: #{tpu_custom_call.1} parent=1 // pred_region
      %157 = vsyncadd [#allocation4], 0
      %s159 = sshll.u32 [#allocation5], 4
      %s160 = int_to_ptr.vmem [resolvable:$true] %s159
      %s161 = sshll.u32 %s3, 4
      %s162 = int_to_ptr.hbm [resolvable:$true] %s161
      %164 = dma.vmem_to_hbm [thread:$0]  %s160, 16, %s162, [#allocation4]
    $region21: #{tpu_custom_call.1} parent=1 // pred_fallthru
      _
    // Predicated region
    $region22: #{tpu_custom_call.1} parent=1 // pred_check
      _
    $region23: #{tpu_custom_call.1} parent=1 // pred_check_branch
      %166 = sbr.rel (0) target = $region25
    $region24: #{tpu_custom_call.1} parent=1 // pred_region
      %168 = dma.done [#allocation4], 16
    $region25: #{tpu_custom_call.1} parent=1 // pred_fallthru
      _
    %169 = vsyncpa [#allocation3], 1
    %170 = vsyncpa [#allocation4], 1

</llo_original>
